<compile_context>
chip_gen: v7x
topology: tpu7x:2x2x1
jax: 0.10.0
libtpu: 0.0.40
codegen_flags: <defaults>
</compile_context>

<pallas_src>
import jax
import jax.numpy as jnp
from jax import lax
from jax.experimental import pallas as pl
from jax.experimental.pallas import tpu as pltpu


def _make_kernel(NB, C_in, C_out, H, W, PADL, HWP):
    HW = H * W

    def kernel(x_ref, wdw_ref, bdw_ref, wpw_ref, bpw_ref, pmask_ref,
               o_ref, xpad_ref):
        # x_ref    : (NB, C_in, HW)   flattened input (lane axis = H*W)
        # wdw_ref  : (C_in, 9)        depthwise 3x3 weights, k = kh*3 + kw
        # bdw_ref  : (C_in, 1)        depthwise bias
        # wpw_ref  : (C_out, C_in)    pointwise weights
        # bpw_ref  : (C_out, 1)       pointwise bias
        # pmask_ref: (2, HW)          0/1 column masks (row0: dw=-1, row1: dw=+1)
        # o_ref    : (NB, C_out, HW)
        # xpad_ref : (C_in, HWP)      zero-padded flat scratch (VMEM)

        # Hoist all weight / mask loads out of the tap loops.  Single cast to
        # f32 for accumulation (for bf16 inputs on v6e/v7x the taps could stay
        # bf16; kept f32 here to match the f32 reference exactly).
        wdw = wdw_ref[...].astype(jnp.float32)
        bdw = bdw_ref[...].astype(jnp.float32)
        wpw = wpw_ref[...].astype(jnp.float32)
        bpw = bpw_ref[...].astype(jnp.float32)
        pm = pmask_ref[...].astype(jnp.float32)
        pm_m1 = pm[0:1, :]   # valid (col != 0)    -> mask for dw = -1 taps
        pm_p1 = pm[1:2, :]   # valid (col != W-1)  -> mask for dw = +1 taps

        for b in range(NB):
            x = x_ref[b].astype(jnp.float32)               # (C_in, HW)

            # Zero-padded flat copy: taps reading above / below the image
            # land in the zeroed bands.  The data store is lane-aligned.
            xpad_ref[...] = jnp.zeros_like(xpad_ref)
            xpad_ref[:, PADL:PADL + HW] = x

            # Depthwise 3x3: 9 shifted whole-tile MACs, grouped by kw so the
            # row-wrap column mask is applied once per column offset.
            acc = jnp.zeros((C_in, HW), jnp.float32)
            for kw in range(3):
                dw_ = kw - 1
                col_acc = jnp.zeros((C_in, HW), jnp.float32)
                for kh in range(3):
                    dh = kh - 1
                    start = PADL + dh * W + dw_
                    win = xpad_ref[:, start:start + HW]    # (C_in, HW)
                    k = kh * 3 + kw
                    col_acc = col_acc + win * wdw[:, k:k + 1]
                if dw_ == -1:
                    col_acc = col_acc * pm_m1
                elif dw_ == 1:
                    col_acc = col_acc * pm_p1
                acc = acc + col_acc
            acc = acc + bdw                                # (C_in, 1) bcast

            # Pointwise 1x1: VPU broadcast MACs for small channel counts,
            # MXU matmul only when both channel dims are MXU-sized.
            if C_in >= 128 and C_out >= 128:
                out = jnp.dot(wpw, acc, preferred_element_type=jnp.float32)
            else:
                out = jnp.zeros((C_out, HW), jnp.float32)
                for ci in range(C_in):
                    out = out + wpw[:, ci:ci + 1] * acc[ci:ci + 1, :]
            out = out + bpw                                # (C_out, 1) bcast

            o_ref[b] = out.astype(o_ref.dtype)             # dense (C_out, HW)

    return kernel


def depth_conv_pallas(x_nchw, w_dw, b_dw, w_pw, b_pw, *, batch_block=1):
    """x_nchw: (N, C_in, H, W); w_dw: (C_in,1,3,3); b_dw: (C_in,);
    w_pw: (C_out, C_in, 1, 1); b_pw: (C_out,). Returns (N, C_out, H, W)."""
    N, C_in, H, W = x_nchw.shape
    C_out = w_pw.shape[0]
    HW = H * W
    NB = batch_block
    assert N % NB == 0, "batch_block must divide N"

    # Lane-aligned left pad (>= W+1) so the scratch data store is aligned and
    # every shifted window stays in-bounds.
    PADL = ((W + 1 + 127) // 128) * 128
    HWP = 2 * PADL + HW

    # Free reshapes only (no transpose, no activation pad).
    x_flat = x_nchw.reshape(N, C_in, HW)
    wdw = w_dw.reshape(C_in, 9)            # (C_in,1,3,3) -> (C_in, 9)
    bdw = b_dw.reshape(C_in, 1)
    wpw = w_pw.reshape(C_out, C_in)        # (C_out,C_in,1,1) -> (C_out, C_in)
    bpw = b_pw.reshape(C_out, 1)

    # 0/1 column-validity masks for the flattened layout (kill the row-wrap
    # contributions of the dw = -1 / +1 taps).  Tiny, constant across grid.
    col = jnp.arange(HW, dtype=jnp.int32) % W
    pmask = jnp.stack([(col != 0), (col != W - 1)]).astype(jnp.float32)

    kernel = _make_kernel(NB, C_in, C_out, H, W, PADL, HWP)

    out_flat = pl.pallas_call(
        kernel,
        out_shape=jax.ShapeDtypeStruct((N, C_out, HW), x_nchw.dtype),
        grid_spec=pltpu.PrefetchScalarGridSpec(
            num_scalar_prefetch=0,
            grid=(N // NB,),
            in_specs=[
                pl.BlockSpec((NB, C_in, HW), lambda n: (n, 0, 0)),
                pl.BlockSpec((C_in, 9), lambda n: (0, 0)),
                pl.BlockSpec((C_in, 1), lambda n: (0, 0)),
                pl.BlockSpec((C_out, C_in), lambda n: (0, 0)),
                pl.BlockSpec((C_out, 1), lambda n: (0, 0)),
                pl.BlockSpec((2, HW), lambda n: (0, 0)),
            ],
            out_specs=pl.BlockSpec((NB, C_out, HW), lambda n: (n, 0, 0)),
            scratch_shapes=[pltpu.VMEM((C_in, HWP), jnp.float32)],
        ),
        compiler_params=pltpu.CompilerParams(
            dimension_semantics=("parallel",)),
    )(x_flat, wdw, bdw, wpw, bpw, pmask)

    # Reshape (free) back to NCHW.
    return out_flat.reshape(N, C_out, H, W)


def depth_conv_ref(x_nchw, w_dw, b_dw, w_pw, b_pw):
    """Pure-JAX reference using lax.conv_general_dilated (NCHW)."""
    C_in = x_nchw.shape[1]
    dn = lax.conv_dimension_numbers(x_nchw.shape, w_dw.shape,
                                    ("NCHW", "OIHW", "NCHW"))
    dw = lax.conv_general_dilated(
        x_nchw, w_dw, window_strides=(1, 1), padding=((1, 1), (1, 1)),
        dimension_numbers=dn, feature_group_count=C_in)
    dw = dw + b_dw.reshape(1, -1, 1, 1)
    pw = lax.conv_general_dilated(
        dw, w_pw, window_strides=(1, 1), padding=((0, 0), (0, 0)),
        dimension_numbers=dn)
    return pw + b_pw.reshape(1, -1, 1, 1)


if __name__ == "__main__":
    N, C_in, C_out, H, W = 2, 4, 8, 16, 16

    key = jax.random.PRNGKey(0)
    k_x, k_wdw, k_bdw, k_wpw, k_bpw = jax.random.split(key, 5)

    x = jax.random.normal(k_x, (N, C_in, H, W), dtype=jnp.float32)
    # Deterministic parameter init (same shapes as the PyTorch module).
    w_dw = jax.random.normal(k_wdw, (C_in, 1, 3, 3), dtype=jnp.float32) * 0.2
    b_dw = jax.random.normal(k_bdw, (C_in,), dtype=jnp.float32) * 0.1
    w_pw = jax.random.normal(k_wpw, (C_out, C_in, 1, 1), dtype=jnp.float32) * 0.2
    b_pw = jax.random.normal(k_bpw, (C_out,), dtype=jnp.float32) * 0.1

    out = depth_conv_pallas(x, w_dw, b_dw, w_pw, b_pw)
    out = jax.block_until_ready(out)

    ref = jax.block_until_ready(depth_conv_ref(x, w_dw, b_dw, w_pw, b_pw))
    assert out.shape == (N, C_out, H, W)
    assert jnp.allclose(out, ref, atol=1e-4, rtol=1e-4), \
        f"max abs err {jnp.max(jnp.abs(out - ref))}"

    print("KERNEL_OK")
</pallas_src>

<mosaic_0001>
module attributes {stable_mosaic.version = 11 : i64} {
  func.func @kernel(%arg0: i32, %arg1: memref<1x4x256xf32, #tpu.memory_space<vmem>>, %arg2: memref<4x9xf32, #tpu.memory_space<vmem>>, %arg3: memref<4x1xf32, #tpu.memory_space<vmem>>, %arg4: memref<8x4xf32, #tpu.memory_space<vmem>>, %arg5: memref<8x1xf32, #tpu.memory_space<vmem>>, %arg6: memref<2x256xf32, #tpu.memory_space<vmem>>, %arg7: memref<1x8x256xf32, #tpu.memory_space<vmem>>, %arg8: memref<4x512xf32, #tpu.memory_space<vmem>>) attributes {dimension_semantics = [#tpu.dimension_semantics<parallel>], iteration_bounds = array<i64: 2>, scalar_prefetch = 0 : i64, scratch_operands = 1 : i64, tpu.core_type = #tpu.core_type<tc>, window_params = [{transform_indices = @transform_0, window_bounds = array<i64: 1, 4, 256>}, {pipeline_mode = #tpu.pipeline_mode<synchronous>, transform_indices = @transform_1, window_bounds = array<i64: 4, 9>}, {pipeline_mode = #tpu.pipeline_mode<synchronous>, transform_indices = @transform_2, window_bounds = array<i64: 4, 1>}, {pipeline_mode = #tpu.pipeline_mode<synchronous>, transform_indices = @transform_3, window_bounds = array<i64: 8, 4>}, {pipeline_mode = #tpu.pipeline_mode<synchronous>, transform_indices = @transform_4, window_bounds = array<i64: 8, 1>}, {pipeline_mode = #tpu.pipeline_mode<synchronous>, transform_indices = @transform_5, window_bounds = array<i64: 2, 256>}, {transform_indices = @transform_6, window_bounds = array<i64: 1, 8, 256>}]} {
    %c0 = arith.constant 0 : index
    %c0_0 = arith.constant 0 : index
    %0 = vector.load %arg2[%c0, %c0_0] : memref<4x9xf32, #tpu.memory_space<vmem>>, vector<4x9xf32>
    %c0_1 = arith.constant 0 : index
    %c0_2 = arith.constant 0 : index
    %1 = vector.load %arg3[%c0_1, %c0_2] : memref<4x1xf32, #tpu.memory_space<vmem>>, vector<4x1xf32>
    %c0_3 = arith.constant 0 : index
    %c0_4 = arith.constant 0 : index
    %2 = vector.load %arg4[%c0_3, %c0_4] : memref<8x4xf32, #tpu.memory_space<vmem>>, vector<8x4xf32>
    %c0_5 = arith.constant 0 : index
    %c0_6 = arith.constant 0 : index
    %3 = vector.load %arg5[%c0_5, %c0_6] : memref<8x1xf32, #tpu.memory_space<vmem>>, vector<8x1xf32>
    %c0_7 = arith.constant 0 : index
    %c0_8 = arith.constant 0 : index
    %4 = vector.load %arg6[%c0_7, %c0_8] : memref<2x256xf32, #tpu.memory_space<vmem>>, vector<2x256xf32>
    %5 = vector.extract_strided_slice %4 {offsets = [0, 0], sizes = [1, 256], strides = [1, 1]} : vector<2x256xf32> to vector<1x256xf32>
    %6 = vector.extract_strided_slice %4 {offsets = [1, 0], sizes = [1, 256], strides = [1, 1]} : vector<2x256xf32> to vector<1x256xf32>
    %c0_9 = arith.constant 0 : index
    %c0_10 = arith.constant 0 : index
    %c0_11 = arith.constant 0 : index
    %7 = vector.load %arg1[%c0_9, %c0_10, %c0_11] : memref<1x4x256xf32, #tpu.memory_space<vmem>>, vector<1x4x256xf32>
    %8 = vector.shape_cast %7 : vector<1x4x256xf32> to vector<4x256xf32>
    %cst = arith.constant 0.000000e+00 : f32
    %9 = vector.broadcast %cst : f32 to vector<4x512xf32>
    %c0_12 = arith.constant 0 : index
    %c0_13 = arith.constant 0 : index
    %10 = vector.load %arg8[%c0_12, %c0_13] : memref<4x512xf32, #tpu.memory_space<vmem>>, vector<4x512xf32>
    tpu.vector_store %arg8[%c0_12, %c0_13], %9 {strides = array<i32>} : memref<4x512xf32, #tpu.memory_space<vmem>>, vector<4x512xf32>,
    %c0_14 = arith.constant 0 : index
    %c128 = arith.constant 128 : index
    %11 = vector.load %arg8[%c0_14, %c128] : memref<4x512xf32, #tpu.memory_space<vmem>>, vector<4x256xf32>
    tpu.vector_store %arg8[%c0_14, %c128], %8 {strides = array<i32>} : memref<4x512xf32, #tpu.memory_space<vmem>>, vector<4x256xf32>,
    %cst_15 = arith.constant 0.000000e+00 : f32
    %12 = vector.broadcast %cst_15 : f32 to vector<4x256xf32>
    %cst_16 = arith.constant 0.000000e+00 : f32
    %13 = vector.broadcast %cst_16 : f32 to vector<4x256xf32>
    %c0_17 = arith.constant 0 : index
    %c111 = arith.constant 111 : index
    %14 = vector.load %arg8[%c0_17, %c111] : memref<4x512xf32, #tpu.memory_space<vmem>>, vector<4x256xf32>
    %15 = vector.extract_strided_slice %0 {offsets = [0, 0], sizes = [4, 1], strides = [1, 1]} : vector<4x9xf32> to vector<4x1xf32>
    %16 = vector.broadcast %15 : vector<4x1xf32> to vector<4x256xf32>
    %17 = arith.mulf %14, %16 : vector<4x256xf32>
    %18 = arith.addf %13, %17 : vector<4x256xf32>
    %c0_18 = arith.constant 0 : index
    %c127 = arith.constant 127 : index
    %19 = vector.load %arg8[%c0_18, %c127] : memref<4x512xf32, #tpu.memory_space<vmem>>, vector<4x256xf32>
    %20 = vector.extract_strided_slice %0 {offsets = [0, 3], sizes = [4, 1], strides = [1, 1]} : vector<4x9xf32> to vector<4x1xf32>
    %21 = vector.broadcast %20 : vector<4x1xf32> to vector<4x256xf32>
    %22 = arith.mulf %19, %21 : vector<4x256xf32>
    %23 = arith.addf %18, %22 : vector<4x256xf32>
    %c0_19 = arith.constant 0 : index
    %c143 = arith.constant 143 : index
    %24 = vector.load %arg8[%c0_19, %c143] : memref<4x512xf32, #tpu.memory_space<vmem>>, vector<4x256xf32>
    %25 = vector.extract_strided_slice %0 {offsets = [0, 6], sizes = [4, 1], strides = [1, 1]} : vector<4x9xf32> to vector<4x1xf32>
    %26 = vector.broadcast %25 : vector<4x1xf32> to vector<4x256xf32>
    %27 = arith.mulf %24, %26 : vector<4x256xf32>
    %28 = arith.addf %23, %27 : vector<4x256xf32>
    %29 = vector.broadcast %5 : vector<1x256xf32> to vector<4x256xf32>
    %30 = arith.mulf %28, %29 : vector<4x256xf32>
    %31 = arith.addf %12, %30 : vector<4x256xf32>
    %cst_20 = arith.constant 0.000000e+00 : f32
    %32 = vector.broadcast %cst_20 : f32 to vector<4x256xf32>
    %c0_21 = arith.constant 0 : index
    %c112 = arith.constant 112 : index
    %33 = vector.load %arg8[%c0_21, %c112] : memref<4x512xf32, #tpu.memory_space<vmem>>, vector<4x256xf32>
    %34 = vector.extract_strided_slice %0 {offsets = [0, 1], sizes = [4, 1], strides = [1, 1]} : vector<4x9xf32> to vector<4x1xf32>
    %35 = vector.broadcast %34 : vector<4x1xf32> to vector<4x256xf32>
    %36 = arith.mulf %33, %35 : vector<4x256xf32>
    %37 = arith.addf %32, %36 : vector<4x256xf32>
    %c0_22 = arith.constant 0 : index
    %c128_23 = arith.constant 128 : index
    %38 = vector.load %arg8[%c0_22, %c128_23] : memref<4x512xf32, #tpu.memory_space<vmem>>, vector<4x256xf32>
    %39 = vector.extract_strided_slice %0 {offsets = [0, 4], sizes = [4, 1], strides = [1, 1]} : vector<4x9xf32> to vector<4x1xf32>
    %40 = vector.broadcast %39 : vector<4x1xf32> to vector<4x256xf32>
    %41 = arith.mulf %38, %40 : vector<4x256xf32>
    %42 = arith.addf %37, %41 : vector<4x256xf32>
    %c0_24 = arith.constant 0 : index
    %c144 = arith.constant 144 : index
    %43 = vector.load %arg8[%c0_24, %c144] : memref<4x512xf32, #tpu.memory_space<vmem>>, vector<4x256xf32>
    %44 = vector.extract_strided_slice %0 {offsets = [0, 7], sizes = [4, 1], strides = [1, 1]} : vector<4x9xf32> to vector<4x1xf32>
    %45 = vector.broadcast %44 : vector<4x1xf32> to vector<4x256xf32>
    %46 = arith.mulf %43, %45 : vector<4x256xf32>
    %47 = arith.addf %42, %46 : vector<4x256xf32>
    %48 = arith.addf %31, %47 : vector<4x256xf32>
    %cst_25 = arith.constant 0.000000e+00 : f32
    %49 = vector.broadcast %cst_25 : f32 to vector<4x256xf32>
    %c0_26 = arith.constant 0 : index
    %c113 = arith.constant 113 : index
    %50 = vector.load %arg8[%c0_26, %c113] : memref<4x512xf32, #tpu.memory_space<vmem>>, vector<4x256xf32>
    %51 = vector.extract_strided_slice %0 {offsets = [0, 2], sizes = [4, 1], strides = [1, 1]} : vector<4x9xf32> to vector<4x1xf32>
    %52 = vector.broadcast %51 : vector<4x1xf32> to vector<4x256xf32>
    %53 = arith.mulf %50, %52 : vector<4x256xf32>
    %54 = arith.addf %49, %53 : vector<4x256xf32>
    %c0_27 = arith.constant 0 : index
    %c129 = arith.constant 129 : index
    %55 = vector.load %arg8[%c0_27, %c129] : memref<4x512xf32, #tpu.memory_space<vmem>>, vector<4x256xf32>
    %56 = vector.extract_strided_slice %0 {offsets = [0, 5], sizes = [4, 1], strides = [1, 1]} : vector<4x9xf32> to vector<4x1xf32>
    %57 = vector.broadcast %56 : vector<4x1xf32> to vector<4x256xf32>
    %58 = arith.mulf %55, %57 : vector<4x256xf32>
    %59 = arith.addf %54, %58 : vector<4x256xf32>
    %c0_28 = arith.constant 0 : index
    %c145 = arith.constant 145 : index
    %60 = vector.load %arg8[%c0_28, %c145] : memref<4x512xf32, #tpu.memory_space<vmem>>, vector<4x256xf32>
    %61 = vector.extract_strided_slice %0 {offsets = [0, 8], sizes = [4, 1], strides = [1, 1]} : vector<4x9xf32> to vector<4x1xf32>
    %62 = vector.broadcast %61 : vector<4x1xf32> to vector<4x256xf32>
    %63 = arith.mulf %60, %62 : vector<4x256xf32>
    %64 = arith.addf %59, %63 : vector<4x256xf32>
    %65 = vector.broadcast %6 : vector<1x256xf32> to vector<4x256xf32>
    %66 = arith.mulf %64, %65 : vector<4x256xf32>
    %67 = arith.addf %48, %66 : vector<4x256xf32>
    %68 = vector.broadcast %1 : vector<4x1xf32> to vector<4x256xf32>
    %69 = arith.addf %67, %68 : vector<4x256xf32>
    %cst_29 = arith.constant 0.000000e+00 : f32
    %70 = vector.broadcast %cst_29 : f32 to vector<8x256xf32>
    %71 = vector.extract_strided_slice %2 {offsets = [0, 0], sizes = [8, 1], strides = [1, 1]} : vector<8x4xf32> to vector<8x1xf32>
    %72 = vector.extract_strided_slice %69 {offsets = [0, 0], sizes = [1, 256], strides = [1, 1]} : vector<4x256xf32> to vector<1x256xf32>
    %73 = vector.broadcast %71 : vector<8x1xf32> to vector<8x256xf32>
    %74 = vector.broadcast %72 : vector<1x256xf32> to vector<8x256xf32>
    %75 = arith.mulf %73, %74 : vector<8x256xf32>
    %76 = arith.addf %70, %75 : vector<8x256xf32>
    %77 = vector.extract_strided_slice %2 {offsets = [0, 1], sizes = [8, 1], strides = [1, 1]} : vector<8x4xf32> to vector<8x1xf32>
    %78 = vector.extract_strided_slice %69 {offsets = [1, 0], sizes = [1, 256], strides = [1, 1]} : vector<4x256xf32> to vector<1x256xf32>
    %79 = vector.broadcast %77 : vector<8x1xf32> to vector<8x256xf32>
    %80 = vector.broadcast %78 : vector<1x256xf32> to vector<8x256xf32>
    %81 = arith.mulf %79, %80 : vector<8x256xf32>
    %82 = arith.addf %76, %81 : vector<8x256xf32>
    %83 = vector.extract_strided_slice %2 {offsets = [0, 2], sizes = [8, 1], strides = [1, 1]} : vector<8x4xf32> to vector<8x1xf32>
    %84 = vector.extract_strided_slice %69 {offsets = [2, 0], sizes = [1, 256], strides = [1, 1]} : vector<4x256xf32> to vector<1x256xf32>
    %85 = vector.broadcast %83 : vector<8x1xf32> to vector<8x256xf32>
    %86 = vector.broadcast %84 : vector<1x256xf32> to vector<8x256xf32>
    %87 = arith.mulf %85, %86 : vector<8x256xf32>
    %88 = arith.addf %82, %87 : vector<8x256xf32>
    %89 = vector.extract_strided_slice %2 {offsets = [0, 3], sizes = [8, 1], strides = [1, 1]} : vector<8x4xf32> to vector<8x1xf32>
    %90 = vector.extract_strided_slice %69 {offsets = [3, 0], sizes = [1, 256], strides = [1, 1]} : vector<4x256xf32> to vector<1x256xf32>
    %91 = vector.broadcast %89 : vector<8x1xf32> to vector<8x256xf32>
    %92 = vector.broadcast %90 : vector<1x256xf32> to vector<8x256xf32>
    %93 = arith.mulf %91, %92 : vector<8x256xf32>
    %94 = arith.addf %88, %93 : vector<8x256xf32>
    %95 = vector.broadcast %3 : vector<8x1xf32> to vector<8x256xf32>
    %96 = arith.addf %94, %95 : vector<8x256xf32>
    %c0_30 = arith.constant 0 : index
    %c0_31 = arith.constant 0 : index
    %c0_32 = arith.constant 0 : index
    %97 = vector.load %arg7[%c0_30, %c0_31, %c0_32] : memref<1x8x256xf32, #tpu.memory_space<vmem>>, vector<1x8x256xf32>
    %98 = vector.shape_cast %97 : vector<1x8x256xf32> to vector<8x256xf32>
    %99 = vector.shape_cast %96 : vector<8x256xf32> to vector<1x8x256xf32>
    tpu.vector_store %arg7[%c0_30, %c0_31, %c0_32], %99 {strides = array<i32>} : memref<1x8x256xf32, #tpu.memory_space<vmem>>, vector<1x8x256xf32>,
    return
  }
  func.func @transform_0(%arg0: i32) -> (i32, i32, i32) {
    %c0_i32 = arith.constant 0 : i32
    %c0_i32_0 = arith.constant 0 : i32
    %c0_i32_1 = arith.constant 0 : i32
    return %arg0, %c0_i32, %c0_i32_0 : i32, i32, i32
  }
  func.func @transform_1(%arg0: i32) -> (i32, i32) {
    %c0_i32 = arith.constant 0 : i32
    %c0_i32_0 = arith.constant 0 : i32
    %c0_i32_1 = arith.constant 0 : i32
    return %c0_i32, %c0_i32_0 : i32, i32
  }
  func.func @transform_2(%arg0: i32) -> (i32, i32) {
    %c0_i32 = arith.constant 0 : i32
    %c0_i32_0 = arith.constant 0 : i32
    %c0_i32_1 = arith.constant 0 : i32
    return %c0_i32, %c0_i32_0 : i32, i32
  }
  func.func @transform_3(%arg0: i32) -> (i32, i32) {
    %c0_i32 = arith.constant 0 : i32
    %c0_i32_0 = arith.constant 0 : i32
    %c0_i32_1 = arith.constant 0 : i32
    return %c0_i32, %c0_i32_0 : i32, i32
  }
  func.func @transform_4(%arg0: i32) -> (i32, i32) {
    %c0_i32 = arith.constant 0 : i32
    %c0_i32_0 = arith.constant 0 : i32
    %c0_i32_1 = arith.constant 0 : i32
    return %c0_i32, %c0_i32_0 : i32, i32
  }
  func.func @transform_5(%arg0: i32) -> (i32, i32) {
    %c0_i32 = arith.constant 0 : i32
    %c0_i32_0 = arith.constant 0 : i32
    %c0_i32_1 = arith.constant 0 : i32
    return %c0_i32, %c0_i32_0 : i32, i32
  }
  func.func @transform_6(%arg0: i32) -> (i32, i32, i32) {
    %c0_i32 = arith.constant 0 : i32
    %c0_i32_0 = arith.constant 0 : i32
    %c0_i32_1 = arith.constant 0 : i32
    return %arg0, %c0_i32, %c0_i32_0 : i32, i32, i32
  }
}

</mosaic_0001>

<llo_original>
// kernel: tpu_custom_call.1
$region0: #{tpu_custom_call.1}
  #allocation0 [shape = 'u32[]', space=smem, size = 0x4, offset = 0x4, fixed_abs, tag = 'smem constant byte address 0x4 - core index']
  #allocation1 [shape = 'u32[144,128]{1,0:T(1,128)}', space=vmem, size = 0x12000, scoped, tag = 'internal scratch']
  #allocation2 [shape = 'f32[4,512]{1,0:T(4,128)}', space=vmem, size = 0x2000, scoped, tag = 'scratch operand']
  %s0 = inlined_call_operand.vmem [shape: f32[2,4,256], index: 0, kind: input, shape index: {}]
  %s1 = inlined_call_operand.vmem [shape: f32[4,9], index: 1, kind: input, shape index: {}]
  %s2 = inlined_call_operand.vmem [shape: f32[4,1], index: 2, kind: input, shape index: {}]
  %s3 = inlined_call_operand.vmem [shape: f32[8,4], index: 3, kind: input, shape index: {}]
  %s4 = inlined_call_operand.vmem [shape: f32[8,1], index: 4, kind: input, shape index: {}]
  %s5 = inlined_call_operand.vmem [shape: f32[2,256], index: 5, kind: input, shape index: {}]
  %s6 = inlined_call_operand.hbm [shape: f32[2,8,256], index: 6, kind: output, shape index: {}]
  %s7 = sld [smem:[#allocation0]]
  $region57: #{tpu_custom_call.1} parent=0
    _
  %s9 = ssub.s32 1, %s7
  %s10 = scalar_select 0, %s9, %s7
  $region1: #{tpu_custom_call.1} parent=0
    #allocation3 [shape = 'u8[16384]{0}', space=vmem, size = 0x4000, scoped, tag = 'output window, operand 0']
    #allocation4 [shape = 's32[2]{0}', space=sflag, size = 0x8, scoped, tag = 'scoped memory for tpu_custom_call.1']
    %11 = vsyncpa [#allocation4], 0
    %s12 = scalar_lea.sflag [#allocation4], 1
    %13 = vsyncpa %s12, 0
    loop: start=0, step=1, limit=4
    $region2: #{tpu_custom_call.1} parent=1 // loop_pre_header
      _
    $region3: #{tpu_custom_call.1} parent=1 // loop_header
      %s15 = sphi 0, %s19
      %p16 = scmp.ge.s32.totalorder %s15, 4
      %s25 = sphi 0, %s27
      %s28 = sphi 0, %s25
      %s29 = sphi 0, %s28
      %s45 = sphi 0, %s29
      %s49 = sphi 0, %s49
      %s51 = sphi 0, %s49
      %s52 = sphi 0, %s51
      %s66 = sphi 0, %s52
      %s70 = sphi 0, %s70
      %s72 = sphi 0, %s70
      %s73 = sphi 0, %s72
      %s87 = sphi 0, %s73
      %s91 = sphi 0, %s91
      %s93 = sphi 0, %s91
      %s94 = sphi 0, %s93
      %s108 = sphi 0, %s94
      %s112 = sphi 0, %s112
      %s114 = sphi 0, %s112
      %s115 = sphi 0, %s114
      %s129 = sphi 0, %s115
      %s133 = sphi 0, %s133
      %s135 = sphi 0, %s133
      %s136 = sphi 0, %s135
      %s150 = sphi 0, %s136
      %s156 = sphi 0, %s158
      %s159 = sphi 0, %s156
      %s160 = sphi 0, %s159
      %s176 = sphi 0, %s160
    $region4: #{tpu_custom_call.1} parent=1 // loop_header_branch
      %18 = sbr.rel (%p16) target = $region8
    $region5: #{tpu_custom_call.1} parent=1 // loop_body
      %s20 = ssub.s32 %s15, 1
      %s21 = ssub.s32 %s15, 2
      %s22 = sadd.s32 %s15, 1
      %s23 = ssub.s32 %s15, %s22
      %p24 = scmp.eq.s32.totalorder %s23, 0
      %s26 = sadd.s32 %s25, 1
      %s27 = scalar_select %p24, %s25, %s26
      %p30 = pneg %p24
      %p31 = scmp.eq.s32.totalorder %s15, 1
      %p32 = por %p30, %p31
      %p33 = scmp.ne.s32.totalorder %s25, %s28
      %p34 = scmp.eq.s32.totalorder %s15, 0
      %p35 = por %p33, %p34
      %p36 = scmp.ne.s32.totalorder %s25, %s28
      %p37 = scmp.eq.s32.totalorder %s20, 1
      %p38 = por %p36, %p37
      %p39 = scmp.ne.s32.totalorder %s28, %s29
      %p40 = scmp.eq.s32.totalorder %s20, 0
      %p41 = por %p39, %p40
      %p42 = scmp.ne.s32.totalorder %s28, %s29
      %p43 = scmp.eq.s32.totalorder %s21, 1
      %p44 = por %p42, %p43
      %p46 = scmp.ne.s32.totalorder %s29, %s45
      %p47 = scmp.eq.s32.totalorder %s21, 0
      %p48 = por %p46, %p47
      %s50 = sadd.s32 %s49, 1
      %p53 = scmp.eq.s32.totalorder %s15, 1
      %p54 = scmp.ne.s32.totalorder %s49, %s51
      %p55 = scmp.eq.s32.totalorder %s15, 0
      %p56 = por %p54, %p55
      %p57 = scmp.ne.s32.totalorder %s49, %s51
      %p58 = scmp.eq.s32.totalorder %s20, 1
      %p59 = por %p57, %p58
      %p60 = scmp.ne.s32.totalorder %s51, %s52
      %p61 = scmp.eq.s32.totalorder %s20, 0
      %p62 = por %p60, %p61
      %p63 = scmp.ne.s32.totalorder %s51, %s52
      %p64 = scmp.eq.s32.totalorder %s21, 1
      %p65 = por %p63, %p64
      %p67 = scmp.ne.s32.totalorder %s52, %s66
      %p68 = scmp.eq.s32.totalorder %s21, 0
      %p69 = por %p67, %p68
      %s71 = sadd.s32 %s70, 1
      %p74 = scmp.eq.s32.totalorder %s15, 1
      %p75 = scmp.ne.s32.totalorder %s70, %s72
      %p76 = scmp.eq.s32.totalorder %s15, 0
      %p77 = por %p75, %p76
      %p78 = scmp.ne.s32.totalorder %s70, %s72
      %p79 = scmp.eq.s32.totalorder %s20, 1
      %p80 = por %p78, %p79
      %p81 = scmp.ne.s32.totalorder %s72, %s73
      %p82 = scmp.eq.s32.totalorder %s20, 0
      %p83 = por %p81, %p82
      %p84 = scmp.ne.s32.totalorder %s72, %s73
      %p85 = scmp.eq.s32.totalorder %s21, 1
      %p86 = por %p84, %p85
      %p88 = scmp.ne.s32.totalorder %s73, %s87
      %p89 = scmp.eq.s32.totalorder %s21, 0
      %p90 = por %p88, %p89
      %s92 = sadd.s32 %s91, 1
      %p95 = scmp.eq.s32.totalorder %s15, 1
      %p96 = scmp.ne.s32.totalorder %s91, %s93
      %p97 = scmp.eq.s32.totalorder %s15, 0
      %p98 = por %p96, %p97
      %p99 = scmp.ne.s32.totalorder %s91, %s93
      %p100 = scmp.eq.s32.totalorder %s20, 1
      %p101 = por %p99, %p100
      %p102 = scmp.ne.s32.totalorder %s93, %s94
      %p103 = scmp.eq.s32.totalorder %s20, 0
      %p104 = por %p102, %p103
      %p105 = scmp.ne.s32.totalorder %s93, %s94
      %p106 = scmp.eq.s32.totalorder %s21, 1
      %p107 = por %p105, %p106
      %p109 = scmp.ne.s32.totalorder %s94, %s108
      %p110 = scmp.eq.s32.totalorder %s21, 0
      %p111 = por %p109, %p110
      %s113 = sadd.s32 %s112, 1
      %p116 = scmp.eq.s32.totalorder %s15, 1
      %p117 = scmp.ne.s32.totalorder %s112, %s114
      %p118 = scmp.eq.s32.totalorder %s15, 0
      %p119 = por %p117, %p118
      %p120 = scmp.ne.s32.totalorder %s112, %s114
      %p121 = scmp.eq.s32.totalorder %s20, 1
      %p122 = por %p120, %p121
      %p123 = scmp.ne.s32.totalorder %s114, %s115
      %p124 = scmp.eq.s32.totalorder %s20, 0
      %p125 = por %p123, %p124
      %p126 = scmp.ne.s32.totalorder %s114, %s115
      %p127 = scmp.eq.s32.totalorder %s21, 1
      %p128 = por %p126, %p127
      %p130 = scmp.ne.s32.totalorder %s115, %s129
      %p131 = scmp.eq.s32.totalorder %s21, 0
      %p132 = por %p130, %p131
      %s134 = sadd.s32 %s133, 1
      %p137 = scmp.eq.s32.totalorder %s15, 1
      %p138 = scmp.ne.s32.totalorder %s133, %s135
      %p139 = scmp.eq.s32.totalorder %s15, 0
      %p140 = por %p138, %p139
      %p141 = scmp.ne.s32.totalorder %s133, %s135
      %p142 = scmp.eq.s32.totalorder %s20, 1
      %p143 = por %p141, %p142
      %p144 = scmp.ne.s32.totalorder %s135, %s136
      %p145 = scmp.eq.s32.totalorder %s20, 0
      %p146 = por %p144, %p145
      %p147 = scmp.ne.s32.totalorder %s135, %s136
      %p148 = scmp.eq.s32.totalorder %s21, 1
      %p149 = por %p147, %p148
      %p151 = scmp.ne.s32.totalorder %s136, %s150
      %p152 = scmp.eq.s32.totalorder %s21, 0
      %p153 = por %p151, %p152
      %s154 = ssub.s32 %s15, %s22
      %p155 = scmp.eq.s32.totalorder %s154, 0
      %s157 = sadd.s32 %s156, 1
      %s158 = scalar_select %p155, %s156, %s157
      %p161 = pneg %p155
      %p162 = scmp.eq.s32.totalorder %s15, 1
      %p163 = por %p161, %p162
      %p164 = scmp.ne.s32.totalorder %s156, %s159
      %p165 = scmp.eq.s32.totalorder %s15, 0
      %p166 = por %p164, %p165
      %p167 = scmp.ne.s32.totalorder %s156, %s159
      %p168 = scmp.eq.s32.totalorder %s20, 1
      %p169 = por %p167, %p168
      %p170 = scmp.ne.s32.totalorder %s159, %s160
      %p171 = scmp.eq.s32.totalorder %s20, 0
      %p172 = por %p170, %p171
      %p173 = scmp.ne.s32.totalorder %s159, %s160
      %p174 = scmp.eq.s32.totalorder %s21, 1
      %p175 = por %p173, %p174
      %p177 = scmp.ne.s32.totalorder %s160, %s176
      %p178 = scmp.eq.s32.totalorder %s21, 0
      %p179 = por %p177, %p178
      %p180 = scmp.le.s32.totalorder 1, %s15
      %p181 = scmp.lt.s32.totalorder %s15, 3
      %p182 = pnand %p180, %p181
      %p183 = pneg %p182
      // Predicated region
      $region9: #{tpu_custom_call.1} parent=5 // pred_check
        _
      $region10: #{tpu_custom_call.1} parent=5 // pred_check_branch
        %185 = sbr.rel (%p182) target = $region12
      $region11: #{tpu_custom_call.1} parent=5 // pred_region
        %s186 = ssub.s32 %s15, 1
        // Predicated region
        $region13: #{tpu_custom_call.1} parent=11 // pred_check
          %p187 = pneg %p62
        $region14: #{tpu_custom_call.1} parent=11 // pred_check_branch
          %189 = sbr.rel (%p187) target = $region16
        $region15: #{tpu_custom_call.1} parent=11 // pred_region
          _
        $region16: #{tpu_custom_call.1} parent=11 // pred_fallthru
          _
        // Predicated region
        $region17: #{tpu_custom_call.1} parent=11 // pred_check
          %p190 = pneg %p83
        $region18: #{tpu_custom_call.1} parent=11 // pred_check_branch
          %192 = sbr.rel (%p190) target = $region20
        $region19: #{tpu_custom_call.1} parent=11 // pred_region
          _
        $region20: #{tpu_custom_call.1} parent=11 // pred_fallthru
          _
        // Predicated region
        $region21: #{tpu_custom_call.1} parent=11 // pred_check
          %p193 = pneg %p104
        $region22: #{tpu_custom_call.1} parent=11 // pred_check_branch
          %195 = sbr.rel (%p193) target = $region24
        $region23: #{tpu_custom_call.1} parent=11 // pred_region
          _
        $region24: #{tpu_custom_call.1} parent=11 // pred_fallthru
          _
        // Predicated region
        $region25: #{tpu_custom_call.1} parent=11 // pred_check
          %p196 = pneg %p125
        $region26: #{tpu_custom_call.1} parent=11 // pred_check_branch
          %198 = sbr.rel (%p196) target = $region28
        $region27: #{tpu_custom_call.1} parent=11 // pred_region
          _
        $region28: #{tpu_custom_call.1} parent=11 // pred_fallthru
          _
        // Predicated region
        $region29: #{tpu_custom_call.1} parent=11 // pred_check
          %p199 = pneg %p146
        $region30: #{tpu_custom_call.1} parent=11 // pred_check_branch
          %201 = sbr.rel (%p199) target = $region32
        $region31: #{tpu_custom_call.1} parent=11 // pred_region
          _
        $region32: #{tpu_custom_call.1} parent=11 // pred_fallthru
          _
      $region12: #{tpu_custom_call.1} parent=5 // pred_fallthru
        _
      %p202 = scmp.lt.s32.totalorder %s15, 2
      // Predicated region
      $region33: #{tpu_custom_call.1} parent=5 // pred_check
        %p203 = pneg %p202
      $region34: #{tpu_custom_call.1} parent=5 // pred_check_branch
        %205 = sbr.rel (%p203) target = $region36
      $region35: #{tpu_custom_call.1} parent=5 // pred_region
        // Predicated region
        $region37: #{tpu_custom_call.1} parent=35 // pred_check
          %p206 = pneg %p35
        $region38: #{tpu_custom_call.1} parent=35 // pred_check_branch
          %208 = sbr.rel (%p206) target = $region40
        $region39: #{tpu_custom_call.1} parent=35 // pred_region
          %p209 = scmp.lt.s32.totalorder %s15, 1
          %s210 = scalar_select %p209, %s15, 1
          %s211 = smul.addr %s210, 2
          %s212 = smul.addr %s211, 4
          %s213 = scalar_lea.vmem %s0, %s212
        $region40: #{tpu_custom_call.1} parent=35 // pred_fallthru
          _
      $region36: #{tpu_custom_call.1} parent=5 // pred_fallthru
        _
      %p214 = scmp.le.s32.totalorder 1, %s15
      %p215 = scmp.lt.s32.totalorder %s15, 3
      %p216 = pnand %p214, %p215
      %p217 = pneg %p216
      // Predicated region
      $region41: #{tpu_custom_call.1} parent=5 // pred_check
        _
      $region42: #{tpu_custom_call.1} parent=5 // pred_check_branch
        %219 = sbr.rel (%p216) target = $region44
      $region43: #{tpu_custom_call.1} parent=5 // pred_region
        %s220 = ssub.s32 %s15, 1
        %p221 = scmp.lt.s32.totalorder %s20, 1
        %s222 = scalar_select %p221, %s20, 1
        %s223 = smul.addr %s222, 2
        %s224 = smul.addr %s223, 4
        %s225 = scalar_lea.vmem %s0, %s224
        %p226 = pneg %p41
        %p227 = pneg %p38
        %p228 = pneg %p62
        %p229 = pneg %p59
        %p230 = pneg %p83
        %p231 = pneg %p80
        %p232 = pneg %p104
        %p233 = pneg %p101
        %p234 = pneg %p125
        %p235 = pneg %p122
        %p236 = pneg %p146
        %p237 = pneg %p143
        %p238 = pneg %p172
        %p239 = pneg %p169
        %s240 = sand.u32 %s159, 1
        %s241 = scalar_lea.sflag [#allocation4], %s240
        %s242 = sand.u32 %s159, 1
        %s243 = smul.addr %s242, 16
        %s244 = scalar_lea.vmem [#allocation3], %s243
        %p245 = scmp.lt.s32.totalorder %s20, 1
        %s246 = scalar_select %p245, %s20, 1
        %s247 = smul.addr %s246, 2
        %s248 = smul.addr %s247, 4
        %s249 = scalar_lea.vmem %s0, %s248
        %v250 = vld [vmem:[%s1] sm:$0xf]
        %v251 = vld [vmem:[%s2] sm:$0xf]
        %v252 = vld [vmem:[%s3] sm:$0xff]
        %v253 = vld [vmem:[%s4] sm:$0xff]
        %v254 = vld [vmem:[%s5] sm:$0xf]
        %v255 = vld [vmem:[%s249] sm:$0xff]
        %256 = vst [vmem:[#allocation2] sm:$0xff] 0.0
        %257 = vst [vmem:[#allocation2 + $0x8] sm:$0xff] 0.0
        %258 = vst [vmem:[#allocation2 + $0x4] sm:$0xff] %v255
        %v259 = vld [vmem:[#allocation2] sm:$0xff]
        %v260 = vld [vmem:[#allocation2 + $0x8] sm:$0xf]
        %262 = vset.pattern.permute.xlu0 0
        %263 = vperm.xlu0 %262, %v250
        %v264 = vpop.permute.xlu0 %263
        %v266 = vunpack.c.l.s4 839922192
        %v267 = vunpack.c.0.s8 %v266
        %v268 = vlaneseq
        %v269 = vshrl.u32 %v268, 7
        %v270 = vsub.s32 %v267, %v269
        %v271 = vrot.slane %v264, %v270
        %v273 = vmul.f32 %v259, %v271
        %v274 = vmul.f32 %v260, %v271
        %v275 = vadd.f32 %v273, 0.0
        %v276 = vadd.f32 %v274, 0.0
        %277 = vset.pattern.permute.xlu0 3
        %278 = vperm.xlu0 %277, %v250
        %v279 = vpop.permute.xlu0 %278
        %v281 = vunpack.c.l.s4 839922192
        %v282 = vunpack.c.0.s8 %v281
        %v283 = vlaneseq
        %v284 = vshrl.u32 %v283, 7
        %v285 = vsub.s32 %v282, %v284
        %v286 = vrot.slane %v279, %v285
        %v288 = vmul.f32 %v259, %v286
        %v289 = vmul.f32 %v260, %v286
        %292 = vrot.lane.b32.xlu0 %v288, 112
        %v293 = vpop.permute.xlu0 %292
        %294 = vrot.lane.b32.xlu0 %v289, 112
        %v295 = vpop.permute.xlu0 %294
        %v296 = vrot.slane %v293, 4
        %v297 = vrot.slane %v295, 4
        %vm298 = vcmask 1043456
        %v299 = vsel %vm298, %v296, %v297
        %vm300 = vcmask 916480
        %v301 = vsel %vm300, %v293, %v299
        %v304 = vadd.f32 %v275, %v301
        %v305 = vadd.f32 %v276, %v295
        %v306 = vld [vmem:[#allocation2 + $0x4] sm:$0xff]
        %v307 = vld [vmem:[#allocation2 + $0xc] sm:$0xf]
        %308 = vset.pattern.permute.xlu0 6
        %309 = vperm.xlu0 %308, %v250
        %v310 = vpop.permute.xlu0 %309
        %v312 = vunpack.c.l.s4 839922192
        %v313 = vunpack.c.0.s8 %v312
        %v314 = vlaneseq
        %v315 = vshrl.u32 %v314, 7
        %v316 = vsub.s32 %v313, %v315
        %v317 = vrot.slane %v310, %v316
        %v319 = vmul.f32 %v306, %v317
        %v320 = vmul.f32 %v307, %v317
        %323 = vrot.lane.b32.xlu0 %v319, 96
        %v324 = vpop.permute.xlu0 %323
        %325 = vrot.lane.b32.xlu0 %v320, 96
        %v326 = vpop.permute.xlu0 %325
        %v327 = vrot.slane %v324, 4
        %vm328 = vcmask 785408
        %v329 = vsel %vm328, %v327, %v324
        %v330 = vsel %vm328, %v327, %v326
        %v333 = vadd.f32 %v304, %v329
        %v334 = vadd.f32 %v305, %v330
        %v336 = vlaneseq
        %v337 = vshrl.u32 %v336, 7
        %v338 = vsub.s32 0, %v337
        %v339 = vrot.slane %v254, %v338
        %v340 = vlaneseq
        %v341 = vshrl.u32 %v340, 7
        %v342 = vsub.s32 2, %v341
        %v343 = vrot.slane %v254, %v342
        %v346 = vlaneseq
        %v347 = vshrl.u32 %v346, 7
        %v348 = vsub.s32 0, %v347
        %v349 = vrot.slane %v339, %v348
        %v350 = vlaneseq
        %v351 = vshrl.u32 %v350, 7
        %v352 = vsub.s32 0, %v351
        %v353 = vrot.slane %v343, %v352
        %v356 = vcombine.low %v349, %v353
        %357 = vrot.lane.b32.xlu0 %v356, 111
        %v358 = vpop.permute.xlu0 %357
        %v359 = vrot.slane %v358, 4
        %vm360 = vcmask 908288
        %v361 = vsel %vm360, %v359, %v358
        %v364 = vmul.f32 %v333, %v361
        %v365 = vmul.f32 %v334, %v359
        %v366 = vadd.f32 %v364, 0.0
        %v367 = vadd.f32 %v365, 0.0
        %v368 = vld [vmem:[#allocation2] sm:$0xff]
        %v369 = vld [vmem:[#allocation2 + $0x8] sm:$0xf]
        %370 = vset.pattern.permute.xlu0 1
        %371 = vperm.xlu0 %370, %v250
        %v372 = vpop.permute.xlu0 %371
        %v374 = vunpack.c.l.s4 839922192
        %v375 = vunpack.c.0.s8 %v374
        %v376 = vlaneseq
        %v377 = vshrl.u32 %v376, 7
        %v378 = vsub.s32 %v375, %v377
        %v379 = vrot.slane %v372, %v378
        %v381 = vmul.f32 %v368, %v379
        %v382 = vmul.f32 %v369, %v379
        %v383 = vadd.f32 %v381, 0.0
        %v384 = vadd.f32 %v382, 0.0
        %v385 = vld [vmem:[#allocation2 + $0x4] sm:$0xff]
        %386 = vset.pattern.permute.xlu0 4
        %387 = vperm.xlu0 %386, %v250
        %v388 = vpop.permute.xlu0 %387
        %v390 = vunpack.c.l.s4 839922192
        %v391 = vunpack.c.0.s8 %v390
        %v392 = vlaneseq
        %v393 = vshrl.u32 %v392, 7
        %v394 = vsub.s32 %v391, %v393
        %v395 = vrot.slane %v388, %v394
        %v397 = vmul.f32 %v385, %v395
        %399 = vrot.lane.b32.xlu0 %v397, 112
        %v400 = vpop.permute.xlu0 %399
        %v401 = vrot.slane %v400, 4
        %v402 = vsel %vm300, %v401, %v400
        %v405 = vadd.f32 %v383, %v402
        %v406 = vadd.f32 %v384, %v401
        %v407 = vld [vmem:[#allocation2 + $0x4] sm:$0xff]
        %v408 = vld [vmem:[#allocation2 + $0xc] sm:$0xf]
        %409 = vset.pattern.permute.xlu0 7
        %410 = vperm.xlu0 %409, %v250
        %v411 = vpop.permute.xlu0 %410
        %v413 = vunpack.c.l.s4 839922192
        %v414 = vunpack.c.0.s8 %v413
        %v415 = vlaneseq
        %v416 = vshrl.u32 %v415, 7
        %v417 = vsub.s32 %v414, %v416
        %v418 = vrot.slane %v411, %v417
        %v420 = vmul.f32 %v407, %v418
        %v421 = vmul.f32 %v408, %v418
        %424 = vrot.lane.b32.xlu0 %v420, 96
        %v425 = vpop.permute.xlu0 %424
        %426 = vrot.lane.b32.xlu0 %v421, 96
        %v427 = vpop.permute.xlu0 %426
        %v428 = vrot.slane %v425, 4
        %v429 = vsel %vm328, %v428, %v425
        %v430 = vsel %vm328, %v428, %v427
        %v433 = vadd.f32 %v405, %v429
        %v434 = vadd.f32 %v406, %v430
        %437 = vrot.lane.b32.xlu0 %v433, 127
        %v438 = vpop.permute.xlu0 %437
        %439 = vrot.lane.b32.xlu0 %v434, 127
        %v440 = vpop.permute.xlu0 %439
        %v441 = vrot.slane %v438, 4
        %v442 = vrot.slane %v440, 4
        %v443 = vsel %vm298, %v441, %v442
        %vm444 = vcmask 1039360
        %v445 = vsel %vm444, %v438, %v443
        %v448 = vadd.f32 %v366, %v445
        %v449 = vadd.f32 %v367, %v440
        %450 = vset.pattern.permute.xlu0 2
        %451 = vperm.xlu0 %450, %v250
        %v452 = vpop.permute.xlu0 %451
        %v454 = vunpack.c.l.s4 839922192
        %v455 = vunpack.c.0.s8 %v454
        %v456 = vlaneseq
        %v457 = vshrl.u32 %v456, 7
        %v458 = vsub.s32 %v455, %v457
        %v459 = vrot.slane %v452, %v458
        %v461 = vmul.f32 %v368, %v459
        %v462 = vmul.f32 %v369, %v459
        %v463 = vadd.f32 %v461, 0.0
        %v464 = vadd.f32 %v462, 0.0
        %465 = vset.pattern.permute.xlu0 5
        %466 = vperm.xlu0 %465, %v250
        %v467 = vpop.permute.xlu0 %466
        %v469 = vunpack.c.l.s4 839922192
        %v470 = vunpack.c.0.s8 %v469
        %v471 = vlaneseq
        %v472 = vshrl.u32 %v471, 7
        %v473 = vsub.s32 %v470, %v472
        %v474 = vrot.slane %v467, %v473
        %v476 = vmul.f32 %v407, %v474
        %v477 = vmul.f32 %v408, %v474
        %480 = vrot.lane.b32.xlu0 %v476, 112
        %v481 = vpop.permute.xlu0 %480
        %482 = vrot.lane.b32.xlu0 %v477, 112
        %v483 = vpop.permute.xlu0 %482
        %v484 = vrot.slane %v481, 4
        %v485 = vsel %vm300, %v484, %v481
        %v486 = vsel %vm300, %v484, %v483
        %v489 = vadd.f32 %v463, %v485
        %v490 = vadd.f32 %v464, %v486
        %491 = vset.pattern.permute.xlu0 8
        %492 = vperm.xlu0 %491, %v250
        %v493 = vpop.permute.xlu0 %492
        %v495 = vunpack.c.l.s4 839922192
        %v496 = vunpack.c.0.s8 %v495
        %v497 = vlaneseq
        %v498 = vshrl.u32 %v497, 7
        %v499 = vsub.s32 %v496, %v498
        %v500 = vrot.slane %v493, %v499
        %v502 = vmul.f32 %v407, %v500
        %v503 = vmul.f32 %v408, %v500
        %506 = vrot.lane.b32.xlu0 %v502, 96
        %v507 = vpop.permute.xlu0 %506
        %508 = vrot.lane.b32.xlu0 %v503, 96
        %v509 = vpop.permute.xlu0 %508
        %v510 = vrot.slane %v507, 4
        %v511 = vsel %vm328, %v510, %v507
        %v512 = vsel %vm328, %v510, %v509
        %v515 = vadd.f32 %v489, %v511
        %v516 = vadd.f32 %v490, %v512
        %v517 = vlaneseq
        %v518 = vshrl.u32 %v517, 7
        %v519 = vsub.s32 1, %v518
        %v520 = vrot.slane %v254, %v519
        %v521 = vlaneseq
        %v522 = vshrl.u32 %v521, 7
        %v523 = vsub.s32 3, %v522
        %v524 = vrot.slane %v254, %v523
        %v527 = vlaneseq
        %v528 = vshrl.u32 %v527, 7
        %v529 = vsub.s32 1, %v528
        %v530 = vrot.slane %v520, %v529
        %v531 = vlaneseq
        %v532 = vshrl.u32 %v531, 7
        %v533 = vsub.s32 1, %v532
        %v534 = vrot.slane %v524, %v533
        %v537 = vcombine.low %v530, %v534
        %538 = vrot.lane.b32.xlu0 %v537, 113
        %v539 = vpop.permute.xlu0 %538
        %v540 = vrot.slane %v539, 4
        %vm541 = vcmask 924672
        %v542 = vsel %vm541, %v540, %v539
        %v545 = vmul.f32 %v515, %v542
        %v546 = vmul.f32 %v516, %v540
        %549 = vrot.lane.b32.xlu0 %v545, 126
        %v550 = vpop.permute.xlu0 %549
        %551 = vrot.lane.b32.xlu0 %v546, 126
        %v552 = vpop.permute.xlu0 %551
        %v553 = vrot.slane %v550, 4
        %v554 = vrot.slane %v552, 4
        %v555 = vsel %vm298, %v553, %v554
        %vm556 = vcmask 1031168
        %v557 = vsel %vm556, %v550, %v555
        %v560 = vadd.f32 %v448, %v557
        %v561 = vadd.f32 %v449, %v552
        %563 = vset.pattern.permute.xlu0 0
        %564 = vperm.xlu0 %563, %v251
        %v565 = vpop.permute.xlu0 %564
        %v567 = vunpack.c.l.s4 839922192
        %v568 = vunpack.c.0.s8 %v567
        %v569 = vlaneseq
        %v570 = vshrl.u32 %v569, 7
        %v571 = vsub.s32 %v568, %v570
        %v572 = vrot.slane %v565, %v571
        %v574 = vadd.f32 %v560, %v572
        %v575 = vadd.f32 %v561, %v572
        %577 = vset.pattern.permute.xlu0 0
        %578 = vperm.xlu0 %577, %v252
        %v579 = vpop.permute.xlu0 %578
        %v583 = vlaneseq
        %v584 = vshrl.u32 %v583, 7
        %v585 = vsub.s32 0, %v584
        %v586 = vrot.slane %v574, %v585
        %v587 = vlaneseq
        %v588 = vshrl.u32 %v587, 7
        %v589 = vsub.s32 4, %v588
        %v590 = vrot.slane %v574, %v589
        %v591 = vlaneseq
        %v592 = vshrl.u32 %v591, 7
        %v593 = vsub.s32 0, %v592
        %v594 = vrot.slane %v575, %v593
        %v598 = vlaneseq
        %v599 = vshrl.u32 %v598, 7
        %v600 = vsub.s32 0, %v599
        %v601 = vrot.slane %v586, %v600
        %v602 = vlaneseq
        %v603 = vshrl.u32 %v602, 7
        %v604 = vsub.s32 0, %v603
        %v605 = vrot.slane %v590, %v604
        %v606 = vlaneseq
        %v607 = vshrl.u32 %v606, 7
        %v608 = vsub.s32 0, %v607
        %v609 = vrot.slane %v594, %v608
        %v610 = vmul.f32 %v579, %v601
        %v611 = vmul.f32 %v579, %v605
        %v612 = vmul.f32 %v579, %v609
        %v613 = vadd.f32 %v610, 0.0
        %v614 = vadd.f32 %v611, 0.0
        %v615 = vadd.f32 %v612, 0.0
        %616 = vset.pattern.permute.xlu0 1
        %617 = vperm.xlu0 %616, %v252
        %v618 = vpop.permute.xlu0 %617
        %v620 = vlaneseq
        %v621 = vshrl.u32 %v620, 7
        %v622 = vsub.s32 1, %v621
        %v623 = vrot.slane %v574, %v622
        %v624 = vlaneseq
        %v625 = vshrl.u32 %v624, 7
        %v626 = vsub.s32 5, %v625
        %v627 = vrot.slane %v574, %v626
        %v628 = vlaneseq
        %v629 = vshrl.u32 %v628, 7
        %v630 = vsub.s32 1, %v629
        %v631 = vrot.slane %v575, %v630
        %v635 = vlaneseq
        %v636 = vshrl.u32 %v635, 7
        %v637 = vsub.s32 1, %v636
        %v638 = vrot.slane %v623, %v637
        %v639 = vlaneseq
        %v640 = vshrl.u32 %v639, 7
        %v641 = vsub.s32 1, %v640
        %v642 = vrot.slane %v627, %v641
        %v643 = vlaneseq
        %v644 = vshrl.u32 %v643, 7
        %v645 = vsub.s32 1, %v644
        %v646 = vrot.slane %v631, %v645
        %v647 = vmul.f32 %v618, %v638
        %v648 = vmul.f32 %v618, %v642
        %v649 = vmul.f32 %v618, %v646
        %v650 = vadd.f32 %v613, %v647
        %v651 = vadd.f32 %v614, %v648
        %v652 = vadd.f32 %v615, %v649
        %653 = vset.pattern.permute.xlu0 2
        %654 = vperm.xlu0 %653, %v252
        %v655 = vpop.permute.xlu0 %654
        %v657 = vlaneseq
        %v658 = vshrl.u32 %v657, 7
        %v659 = vsub.s32 2, %v658
        %v660 = vrot.slane %v574, %v659
        %v661 = vlaneseq
        %v662 = vshrl.u32 %v661, 7
        %v663 = vsub.s32 6, %v662
        %v664 = vrot.slane %v574, %v663
        %v665 = vlaneseq
        %v666 = vshrl.u32 %v665, 7
        %v667 = vsub.s32 2, %v666
        %v668 = vrot.slane %v575, %v667
        %v672 = vlaneseq
        %v673 = vshrl.u32 %v672, 7
        %v674 = vsub.s32 2, %v673
        %v675 = vrot.slane %v660, %v674
        %v676 = vlaneseq
        %v677 = vshrl.u32 %v676, 7
        %v678 = vsub.s32 2, %v677
        %v679 = vrot.slane %v664, %v678
        %v680 = vlaneseq
        %v681 = vshrl.u32 %v680, 7
        %v682 = vsub.s32 2, %v681
        %v683 = vrot.slane %v668, %v682
        %v684 = vmul.f32 %v655, %v675
        %v685 = vmul.f32 %v655, %v679
        %v686 = vmul.f32 %v655, %v683
        %v687 = vadd.f32 %v650, %v684
        %v688 = vadd.f32 %v651, %v685
        %v689 = vadd.f32 %v652, %v686
        %690 = vset.pattern.permute.xlu0 3
        %691 = vperm.xlu0 %690, %v252
        %v692 = vpop.permute.xlu0 %691
        %v694 = vlaneseq
        %v695 = vshrl.u32 %v694, 7
        %v696 = vsub.s32 3, %v695
        %v697 = vrot.slane %v574, %v696
        %v698 = vlaneseq
        %v699 = vshrl.u32 %v698, 7
        %v700 = vsub.s32 7, %v699
        %v701 = vrot.slane %v574, %v700
        %v702 = vlaneseq
        %v703 = vshrl.u32 %v702, 7
        %v704 = vsub.s32 3, %v703
        %v705 = vrot.slane %v575, %v704
        %v709 = vlaneseq
        %v710 = vshrl.u32 %v709, 7
        %v711 = vsub.s32 3, %v710
        %v712 = vrot.slane %v697, %v711
        %v713 = vlaneseq
        %v714 = vshrl.u32 %v713, 7
        %v715 = vsub.s32 3, %v714
        %v716 = vrot.slane %v701, %v715
        %v717 = vlaneseq
        %v718 = vshrl.u32 %v717, 7
        %v719 = vsub.s32 3, %v718
        %v720 = vrot.slane %v705, %v719
        %v721 = vmul.f32 %v692, %v712
        %v722 = vmul.f32 %v692, %v716
        %v723 = vmul.f32 %v692, %v720
        %v724 = vadd.f32 %v687, %v721
        %v725 = vadd.f32 %v688, %v722
        %v726 = vadd.f32 %v689, %v723
        %728 = vset.pattern.permute.xlu0 0
        %729 = vperm.xlu0 %728, %v253
        %v730 = vpop.permute.xlu0 %729
        %v732 = vadd.f32 %v724, %v730
        %v733 = vadd.f32 %v725, %v730
        %v734 = vadd.f32 %v726, %v730
        %738 = vrot.lane.b32.xlu0 %v732, 17
        %v739 = vpop.permute.xlu0 %738
        %740 = vrot.lane.b32.xlu0 %v733, 17
        %v741 = vpop.permute.xlu0 %740
        %742 = vrot.lane.b32.xlu0 %v734, 17
        %v743 = vpop.permute.xlu0 %742
        %vm744 = vcmask 138240
        %v745 = vsel %vm744, %v739, %v741
        %v746 = vsel %vm744, %v741, %v743
        %749 = vst [vmem:[%s244] sm:$0xff] %v745
        %750 = vst [vmem:[%s244 + $0x8] sm:$0xff] %v746
        %s751 = sand.u32 %s159, 1
        %s752 = scalar_lea.sflag [#allocation4], %s751
        %s753 = sand.u32 %s159, 1
        %s754 = smul.addr %s753, 16
        %s755 = scalar_lea.vmem [#allocation3], %s754
        // Predicated region
        $region45: #{tpu_custom_call.1} parent=43 // pred_check
          %p756 = pneg %p169
        $region46: #{tpu_custom_call.1} parent=43 // pred_check_branch
          %758 = sbr.rel (%p756) target = $region48
        $region47: #{tpu_custom_call.1} parent=43 // pred_region
          %s760 = ssub.s32 256, 256
          %761 = vsyncadd %s752, %s760
          %s762 = smul.addr %s20, 2
          %s763 = smul.addr %s762, 128
          %s764 = scalar_lea.hbm %s6, %s763
          %s766 = sshll.u32 %s755, 4
          %s767 = int_to_ptr.vmem [resolvable:$true] %s766
          %769 = dma.vmem_to_hbm [thread:$0]  %s767, 256, %s764, %s752
        $region48: #{tpu_custom_call.1} parent=43 // pred_fallthru
          _
      $region44: #{tpu_custom_call.1} parent=5 // pred_fallthru
        _
      %p770 = scmp.le.s32.totalorder 2, %s15
      // Predicated region
      $region49: #{tpu_custom_call.1} parent=5 // pred_check
        %p771 = pneg %p770
      $region50: #{tpu_custom_call.1} parent=5 // pred_check_branch
        %773 = sbr.rel (%p771) target = $region52
      $region51: #{tpu_custom_call.1} parent=5 // pred_region
        %s774 = ssub.s32 %s15, 2
        // Predicated region
        $region53: #{tpu_custom_call.1} parent=51 // pred_check
          %p775 = pneg %p175
        $region54: #{tpu_custom_call.1} parent=51 // pred_check_branch
          %777 = sbr.rel (%p775) target = $region56
        $region55: #{tpu_custom_call.1} parent=51 // pred_region
          %s778 = sand.u32 %s160, 1
          %s779 = scalar_lea.sflag [#allocation4], %s778
          %s780 = sand.u32 %s160, 1
          %s781 = smul.addr %s780, 16
          %s782 = scalar_lea.vmem [#allocation3], %s781
          %783 = dma.done %s779, 256
        $region56: #{tpu_custom_call.1} parent=51 // pred_fallthru
          _
      $region52: #{tpu_custom_call.1} parent=5 // pred_fallthru
        _
    $region6: #{tpu_custom_call.1} parent=1 // loop_footer
      %s19 = sadd.s32 1, %s15
    $region7: #{tpu_custom_call.1} parent=1 // loop_footer_branch
      %14 = sbr.rel target = $region3
    $region8: #{tpu_custom_call.1} parent=1 // loop_exit
      _
    %784 = vsyncpa [#allocation4], 1
    %s785 = scalar_lea.sflag [#allocation4], 1
    %786 = vsyncpa %s785, 1

</llo_original>
